<compile_context>
chip_gen: v7x
topology: tpu7x:2x2x1
jax: 0.10.0
libtpu: 0.0.40
codegen_flags: <defaults>
</compile_context>

<pallas_src>
import jax
import jax.numpy as jnp
from jax.experimental import pallas as pl
from jax.experimental.pallas import tpu as pltpu


def _drop_path_kernel(scale_ref, x_ref, o_ref):
    # scale_ref: (TN, 1) f32, x_ref/o_ref: (TN, TL) in x dtype.
    # One broadcast VPU multiply; DMA of x in/out is the only real cost.
    o_ref[...] = x_ref[...] * scale_ref[...].astype(x_ref.dtype)


def _pick_block(n, l, itemsize, target_bytes=2 * 1024 * 1024):
    """Pick (TN, TL) satisfying the TPU (8, 128) block constraint.

    Last block dim must be a multiple of 128 or equal the full dim; the
    second-to-last a multiple of 8 or equal the full dim.  Target ~2 MiB per
    block so per-grid-step overhead (~0.35 us) is amortized and double
    buffering stays far below every generation's scoped VMEM limit
    (16/32/32 MiB on v5e/v6e/v7x).
    """
    # Lane-dim tile: keep it a large multiple of 128 that divides L.
    tl = l
    if l % 128 == 0:
        # Cap a single row at ~64K lanes (256 KiB f32) so TN can be > 1.
        while tl > 512 * 128 and tl % 2 == 0 and (tl // 2) % 128 == 0:
            tl //= 2
    # Sample-dim tile: as many rows as fit in the byte budget.
    row_bytes = max(tl * itemsize, 1)
    tn = max(1, min(n, target_bytes // row_bytes))
    if tn < n:
        tn = (tn // 8) * 8          # sublane multiple when not the full dim
        if tn == 0 or n % tn != 0:
            tn = n                  # fall back to the full (always legal) dim
    return tn, tl


def drop_path(x, key, *, drop_prob=0.25, training=True):
    """JAX/Pallas equivalent of transformer_engine DropPath.forward."""
    if drop_prob == 0.0 or not training:
        # Identity path, exactly as in the PyTorch module.
        return x
    keep_prob = 1.0 - drop_prob

    n = x.shape[0]
    # Per-sample mask computed once, outside the kernel:
    #   floor(keep_prob + U[0,1)) -> 0.0 or 1.0   (matches random_tensor.floor_())
    u = jax.random.uniform(key, (n, 1), dtype=jnp.float32)
    mask = jnp.floor(keep_prob + u)
    scale = mask / keep_prob          # 0.0 or 1/keep_prob, i.e. div(keep_prob) * mask

    # Flatten all non-sample dims into a single lane-dense axis.
    l = 1
    for d in x.shape[1:]:
        l *= int(d)
    x2 = x.reshape(n, l)

    tn, tl = _pick_block(n, l, jnp.dtype(x.dtype).itemsize)
    grid = (n // tn, l // tl)

    out2 = pl.pallas_call(
        _drop_path_kernel,
        out_shape=jax.ShapeDtypeStruct((n, l), x.dtype),
        grid=grid,
        in_specs=[
            pl.BlockSpec((tn, 1), lambda i, j: (i, 0)),    # per-row scale
            pl.BlockSpec((tn, tl), lambda i, j: (i, j)),   # data tile
        ],
        out_specs=pl.BlockSpec((tn, tl), lambda i, j: (i, j)),
        compiler_params=pltpu.CompilerParams(
            dimension_semantics=("parallel", "parallel"),  # independent tiles
        ),
    )(scale, x2)
    return out2.reshape(x.shape)


if __name__ == "__main__":
    key = jax.random.PRNGKey(0)
    xkey, dkey = jax.random.split(key)

    # (N, S, H): N samples, each gets an independent keep/drop decision.
    x = jax.random.normal(xkey, (8, 16, 128), dtype=jnp.float32)

    drop_prob = 0.25
    keep_prob = 1.0 - drop_prob

    out = drop_path(x, dkey, drop_prob=drop_prob, training=True)
    out = jax.block_until_ready(out)

    # Sanity: every sample must equal either 0 or x / keep_prob.
    ok = True
    for i in range(x.shape[0]):
        oi = out[i]
        is_dropped = bool(jnp.allclose(oi, jnp.zeros_like(oi)))
        is_kept = bool(jnp.allclose(oi, x[i] / keep_prob, atol=1e-5, rtol=1e-5))
        ok = ok and (is_dropped or is_kept)
    assert ok, "DropPath output is neither zero nor x/keep_prob for some sample"

    # Eval / zero-prob paths must be the identity.
    ident = drop_path(x, dkey, drop_prob=0.0, training=True)
    assert bool(jnp.array_equal(ident, x))
    ident2 = drop_path(x, dkey, drop_prob=drop_prob, training=False)
    assert bool(jnp.array_equal(ident2, x))

    print("KERNEL_OK")
</pallas_src>

<mosaic_0001>
module attributes {stable_mosaic.version = 11 : i64} {
  func.func @_drop_path_kernel(%arg0: i32, %arg1: i32, %arg2: memref<8x1xf32, #tpu.memory_space<vmem>>, %arg3: memref<8x2048xf32, #tpu.memory_space<vmem>>, %arg4: memref<8x2048xf32, #tpu.memory_space<vmem>>) attributes {dimension_semantics = [#tpu.dimension_semantics<parallel>, #tpu.dimension_semantics<parallel>], iteration_bounds = array<i64: 1, 1>, scalar_prefetch = 0 : i64, scratch_operands = 0 : i64, tpu.core_type = #tpu.core_type<tc>, window_params = [{transform_indices = @transform_0, window_bounds = array<i64: 8, 1>}, {transform_indices = @transform_1, window_bounds = array<i64: 8, 2048>}, {transform_indices = @transform_2, window_bounds = array<i64: 8, 2048>}]} {
    %c0 = arith.constant 0 : index
    %c0_0 = arith.constant 0 : index
    %0 = vector.load %arg3[%c0, %c0_0] : memref<8x2048xf32, #tpu.memory_space<vmem>>, vector<8x2048xf32>
    %c0_1 = arith.constant 0 : index
    %c0_2 = arith.constant 0 : index
    %1 = vector.load %arg2[%c0_1, %c0_2] : memref<8x1xf32, #tpu.memory_space<vmem>>, vector<8x1xf32>
    %2 = vector.broadcast %1 : vector<8x1xf32> to vector<8x2048xf32>
    %3 = arith.mulf %0, %2 : vector<8x2048xf32>
    %c0_3 = arith.constant 0 : index
    %c0_4 = arith.constant 0 : index
    %4 = vector.load %arg4[%c0_3, %c0_4] : memref<8x2048xf32, #tpu.memory_space<vmem>>, vector<8x2048xf32>
    tpu.vector_store %arg4[%c0_3, %c0_4], %3 {strides = array<i32>} : memref<8x2048xf32, #tpu.memory_space<vmem>>, vector<8x2048xf32>,
    return
  }
  func.func @transform_0(%arg0: i32, %arg1: i32) -> (i32, i32) {
    %c0_i32 = arith.constant 0 : i32
    %c0_i32_0 = arith.constant 0 : i32
    return %arg0, %c0_i32 : i32, i32
  }
  func.func @transform_1(%arg0: i32, %arg1: i32) -> (i32, i32) {
    %c0_i32 = arith.constant 0 : i32
    return %arg0, %arg1 : i32, i32
  }
  func.func @transform_2(%arg0: i32, %arg1: i32) -> (i32, i32) {
    %c0_i32 = arith.constant 0 : i32
    return %arg0, %arg1 : i32, i32
  }
}

</mosaic_0001>

<llo_original>
// kernel: tpu_custom_call.1
$region0: #{tpu_custom_call.1}
  #allocation0 [shape = 'u32[]', space=smem, size = 0x4, offset = 0x4, fixed_abs, tag = 'smem constant byte address 0x4 - core index']
  #allocation1 [shape = 'u32[144,128]{1,0:T(1,128)}', space=vmem, size = 0x12000, scoped, tag = 'internal scratch']
  %s0 = inlined_call_operand.vmem [shape: f32[8,1], index: 0, kind: input, shape index: {}]
  %s1 = inlined_call_operand.hbm [shape: f32[8,2048], index: 1, kind: input, shape index: {}]
  %s2 = inlined_call_operand.hbm [shape: f32[8,2048], index: 2, kind: output, shape index: {}]
  %s3 = sld [smem:[#allocation0]]
  $region22: #{tpu_custom_call.1} parent=0
    _
  %s5 = ssub.s32 1, %s3
  %s6 = scalar_select 0, %s5, %s3
  $region1: #{tpu_custom_call.1} parent=0
    #allocation2 [shape = 'u8[65536]{0}', space=vmem, size = 0x10000, scoped, tag = 'input window, operand 1, single buffered']
    #allocation3 [shape = 's32[1]{0}', space=sflag, size = 0x4, scoped, tag = 'scoped memory for tpu_custom_call.1']
    #allocation4 [shape = 's32[1]{0}', space=sflag, size = 0x4, scoped, tag = 'scoped memory for tpu_custom_call.1']
    #allocation5 [shape = 'u8[65536]{0}', space=vmem, size = 0x10000, scoped, tag = 'output window, operand 0, single buffered']
    %7 = vsyncpa [#allocation3], 0
    %8 = vsyncpa [#allocation4], 0
    // Predicated region
    $region2: #{tpu_custom_call.1} parent=1 // pred_check
      _
    $region3: #{tpu_custom_call.1} parent=1 // pred_check_branch
      %10 = sbr.rel (0) target = $region5
    $region4: #{tpu_custom_call.1} parent=1 // pred_region
      _
    $region5: #{tpu_custom_call.1} parent=1 // pred_fallthru
      _
    // Predicated region
    $region6: #{tpu_custom_call.1} parent=1 // pred_check
      _
    $region7: #{tpu_custom_call.1} parent=1 // pred_check_branch
      %12 = sbr.rel (0) target = $region9
    $region8: #{tpu_custom_call.1} parent=1 // pred_region
      %s14 = ssub.s32 2048, 2048
      %15 = vsyncadd [#allocation3], %s14
      %s17 = sshll.u32 [#allocation2], 4
      %s18 = int_to_ptr.vmem [resolvable:$true] %s17
      %20 = dma.hbm_to_vmem [thread:$0]  %s1, 2048, %s18, [#allocation3]
    $region9: #{tpu_custom_call.1} parent=1 // pred_fallthru
      _
    // Predicated region
    $region10: #{tpu_custom_call.1} parent=1 // pred_check
      _
    $region11: #{tpu_custom_call.1} parent=1 // pred_check_branch
      %22 = sbr.rel (0) target = $region13
    $region12: #{tpu_custom_call.1} parent=1 // pred_region
      %23 = dma.done [#allocation3], 2048
    $region13: #{tpu_custom_call.1} parent=1 // pred_fallthru
      _
    %v24 = vld [vmem:[#allocation2] sm:$0xff]
    %v25 = vld [vmem:[#allocation2 + $0x8] sm:$0xff]
    %v26 = vld [vmem:[#allocation2 + $0x10] sm:$0xff]
    %v27 = vld [vmem:[#allocation2 + $0x18] sm:$0xff]
    %v28 = vld [vmem:[#allocation2 + $0x20] sm:$0xff]
    %v29 = vld [vmem:[#allocation2 + $0x28] sm:$0xff]
    %v30 = vld [vmem:[#allocation2 + $0x30] sm:$0xff]
    %v31 = vld [vmem:[#allocation2 + $0x38] sm:$0xff]
    %v32 = vld [vmem:[#allocation2 + $0x40] sm:$0xff]
    %v33 = vld [vmem:[#allocation2 + $0x48] sm:$0xff]
    %v34 = vld [vmem:[#allocation2 + $0x50] sm:$0xff]
    %v35 = vld [vmem:[#allocation2 + $0x58] sm:$0xff]
    %v36 = vld [vmem:[#allocation2 + $0x60] sm:$0xff]
    %v37 = vld [vmem:[#allocation2 + $0x68] sm:$0xff]
    %v38 = vld [vmem:[#allocation2 + $0x70] sm:$0xff]
    %v39 = vld [vmem:[#allocation2 + $0x78] sm:$0xff]
    %v40 = vld [vmem:[%s0] sm:$0xff]
    %42 = vset.pattern.permute.xlu0 0
    %43 = vperm.xlu0 %42, %v40
    %v44 = vpop.permute.xlu0 %43
    %v46 = vmul.f32 %v24, %v44
    %v47 = vmul.f32 %v25, %v44
    %v48 = vmul.f32 %v26, %v44
    %v49 = vmul.f32 %v27, %v44
    %v50 = vmul.f32 %v28, %v44
    %v51 = vmul.f32 %v29, %v44
    %v52 = vmul.f32 %v30, %v44
    %v53 = vmul.f32 %v31, %v44
    %v54 = vmul.f32 %v32, %v44
    %v55 = vmul.f32 %v33, %v44
    %v56 = vmul.f32 %v34, %v44
    %v57 = vmul.f32 %v35, %v44
    %v58 = vmul.f32 %v36, %v44
    %v59 = vmul.f32 %v37, %v44
    %v60 = vmul.f32 %v38, %v44
    %v61 = vmul.f32 %v39, %v44
    %62 = vst [vmem:[#allocation5] sm:$0xff] %v46
    %63 = vst [vmem:[#allocation5 + $0x8] sm:$0xff] %v47
    %64 = vst [vmem:[#allocation5 + $0x10] sm:$0xff] %v48
    %65 = vst [vmem:[#allocation5 + $0x18] sm:$0xff] %v49
    %66 = vst [vmem:[#allocation5 + $0x20] sm:$0xff] %v50
    %67 = vst [vmem:[#allocation5 + $0x28] sm:$0xff] %v51
    %68 = vst [vmem:[#allocation5 + $0x30] sm:$0xff] %v52
    %69 = vst [vmem:[#allocation5 + $0x38] sm:$0xff] %v53
    %70 = vst [vmem:[#allocation5 + $0x40] sm:$0xff] %v54
    %71 = vst [vmem:[#allocation5 + $0x48] sm:$0xff] %v55
    %72 = vst [vmem:[#allocation5 + $0x50] sm:$0xff] %v56
    %73 = vst [vmem:[#allocation5 + $0x58] sm:$0xff] %v57
    %74 = vst [vmem:[#allocation5 + $0x60] sm:$0xff] %v58
    %75 = vst [vmem:[#allocation5 + $0x68] sm:$0xff] %v59
    %76 = vst [vmem:[#allocation5 + $0x70] sm:$0xff] %v60
    %77 = vst [vmem:[#allocation5 + $0x78] sm:$0xff] %v61
    // Predicated region
    $region14: #{tpu_custom_call.1} parent=1 // pred_check
      _
    $region15: #{tpu_custom_call.1} parent=1 // pred_check_branch
      %79 = sbr.rel (0) target = $region17
    $region16: #{tpu_custom_call.1} parent=1 // pred_region
      %s81 = ssub.s32 2048, 2048
      %82 = vsyncadd [#allocation4], %s81
      %s84 = sshll.u32 [#allocation5], 4
      %s85 = int_to_ptr.vmem [resolvable:$true] %s84
      %87 = dma.vmem_to_hbm [thread:$0]  %s85, 2048, %s2, [#allocation4]
    $region17: #{tpu_custom_call.1} parent=1 // pred_fallthru
      _
    // Predicated region
    $region18: #{tpu_custom_call.1} parent=1 // pred_check
      _
    $region19: #{tpu_custom_call.1} parent=1 // pred_check_branch
      %89 = sbr.rel (0) target = $region21
    $region20: #{tpu_custom_call.1} parent=1 // pred_region
      %90 = dma.done [#allocation4], 2048
    $region21: #{tpu_custom_call.1} parent=1 // pred_fallthru
      _
    %91 = vsyncpa [#allocation3], 1
    %92 = vsyncpa [#allocation4], 1

</llo_original>
